<compile_context>
chip_gen: v7x
topology: tpu7x:2x2x1
jax: 0.10.0
libtpu: 0.0.40
codegen_flags: <defaults>
</compile_context>

<pallas_src>
import functools

import jax
import jax.numpy as jnp
from jax.experimental import pallas as pl
from jax.experimental.pallas import tpu as pltpu


def _round_up(x, m):
    return (x + m - 1) // m * m


_VMEM_BUDGET = 40 * 1024 * 1024   # tile-sizing budget; fits v7x's 64 MiB VMEM
_VMEM_LIMIT = 48 * 1024 * 1024    # scoped-VMEM limit handed to Mosaic


# ---------------------------------------------------------------------------
# Kernels
# ---------------------------------------------------------------------------

def _linear_kernel_fused(x_ref, w_ref, b_ref, o_ref):
    """Fast path: whole-C resident weight -> out = x @ W_t + b, no scratch."""
    o_ref[...] = (
        jnp.dot(x_ref[...], w_ref[...], preferred_element_type=jnp.float32)
        + b_ref[...]
    ).astype(o_ref.dtype)


def _linear_kernel_acc(x_ref, w_ref, b_ref, o_ref, acc_ref):
    """K-tiled path for very large n_channels: f32 VMEM accumulator."""
    k = pl.program_id(1)

    @pl.when(k == 0)
    def _():
        # Fold the bias into the accumulator init (saves an epilogue add).
        acc_ref[...] = jnp.broadcast_to(b_ref[...], acc_ref.shape)

    acc_ref[...] += jnp.dot(
        x_ref[...], w_ref[...], preferred_element_type=jnp.float32
    )

    @pl.when(k == pl.num_programs(1) - 1)
    def _():
        o_ref[...] = acc_ref[...].astype(o_ref.dtype)


# ---------------------------------------------------------------------------
# Wrapper
# ---------------------------------------------------------------------------

def _pick_batch_tile(B, tb_cap):
    """Balanced batch tiling: single full-dim block, or even count of ~equal tiles."""
    n_b = pl.cdiv(B, tb_cap)
    if n_b == 1:
        return B, 1                      # full-dim block: no ragged tile at all
    if n_b % 2:                          # even tile count feeds both v7x TCs evenly
        n_b += 1
    TB = _round_up(pl.cdiv(B, n_b), 8)
    return TB, pl.cdiv(B, TB)


def classifier_1fc_forward(x, weight, bias, droprate=0.0, *, tb_max=1024, tk_max=2048):
    """Forward pass of Classifier_1fc.

    x:      [B, C]           activations
    weight: [n_classes, C]   (PyTorch nn.Linear layout)
    bias:   [n_classes]
    """
    # droprate == 0.0 (the module default) => dropout is a no-op.
    # TODO(synk): training-mode dropout (droprate != 0.0) not implemented.
    assert droprate == 0.0, "only droprate=0.0 (no dropout) is supported"

    B, C = x.shape
    N, Cw = weight.shape
    assert Cw == C, "weight shape must be [n_classes, n_channels]"

    N_pad = _round_up(N, 128)
    isz = jnp.dtype(x.dtype).itemsize

    # One-time weight transpose to MXU-native [C, N_pad]; tiny vs x traffic and
    # constant-folded for jitted parameters.  Bias kept in f32 for accumulation.
    w_t = jnp.pad(weight.T, ((0, 0), (0, N_pad - N)))
    b_p = jnp.pad(bias.astype(jnp.float32), (0, N_pad - N)).reshape(1, N_pad)

    # VMEM cost of a fully resident (double-buffered) weight + minimal x/out tiles.
    w_bytes = 2 * C * N_pad * isz
    per_row = 2 * C * isz + 2 * N_pad * isz
    fast_path = w_bytes + 8 * per_row + 2 * N_pad * 4 <= _VMEM_BUDGET

    if fast_path:
        # ---- single K tile: no accumulator, no padding of x whatsoever ------
        tb_budget = max(8, (_VMEM_BUDGET - w_bytes) // per_row // 8 * 8)
        TB, n_b = _pick_batch_tile(B, min(tb_max, tb_budget))

        cost = pl.CostEstimate(
            flops=2 * B * C * N_pad,
            transcendentals=0,
            bytes_accessed=(B * C + C * N_pad + N_pad + B * N_pad) * isz,
        )

        out = pl.pallas_call(
            _linear_kernel_fused,
            out_shape=jax.ShapeDtypeStruct((B, N_pad), x.dtype),
            grid_spec=pltpu.PrefetchScalarGridSpec(
                num_scalar_prefetch=0,
                grid=(n_b,),
                in_specs=[
                    # activations: one block per batch step, streamed once
                    pl.BlockSpec((TB, C), lambda i: (i, 0)),
                    # weight: batch-independent index_map -> VMEM-resident
                    pl.BlockSpec((C, N_pad), lambda i: (0, 0)),
                    # bias: single resident block
                    pl.BlockSpec((1, N_pad), lambda i: (0, 0)),
                ],
                out_specs=pl.BlockSpec((TB, N_pad), lambda i: (i, 0)),
            ),
            compiler_params=pltpu.CompilerParams(
                dimension_semantics=("parallel",),
                vmem_limit_bytes=_VMEM_LIMIT,
            ),
            cost_estimate=cost,
        )(x, w_t, b_p)
    else:
        # ---- very large n_channels: tile K, accumulate in f32 ---------------
        n_k = pl.cdiv(C, tk_max)
        tK = _round_up(pl.cdiv(C, n_k), 128)
        C_pad = n_k * tK
        # Zero-padding along C only (required so no garbage enters the
        # contraction); batch is still left unpadded.
        x_p = jnp.pad(x, ((0, 0), (0, C_pad - C)))
        w_p = jnp.pad(w_t, ((0, C_pad - C), (0, 0)))

        w_tile_bytes = 2 * tK * N_pad * isz
        per_row_t = 2 * tK * isz + 2 * N_pad * isz + N_pad * 4   # + f32 acc row
        tb_budget = max(8, (_VMEM_BUDGET - w_tile_bytes) // per_row_t // 8 * 8)
        TB, n_b = _pick_batch_tile(B, min(tb_max, tb_budget))

        cost = pl.CostEstimate(
            flops=2 * B * C_pad * N_pad,
            transcendentals=0,
            bytes_accessed=(B * C_pad + n_b * C_pad * N_pad + N_pad + B * N_pad) * isz,
        )

        out = pl.pallas_call(
            _linear_kernel_acc,
            out_shape=jax.ShapeDtypeStruct((B, N_pad), x.dtype),
            grid_spec=pltpu.PrefetchScalarGridSpec(
                num_scalar_prefetch=0,
                grid=(n_b, n_k),
                in_specs=[
                    pl.BlockSpec((TB, tK), lambda i, k: (i, k)),
                    pl.BlockSpec((tK, N_pad), lambda i, k: (k, 0)),
                    pl.BlockSpec((1, N_pad), lambda i, k: (0, 0)),
                ],
                out_specs=pl.BlockSpec((TB, N_pad), lambda i, k: (i, 0)),
                scratch_shapes=[pltpu.VMEM((TB, N_pad), jnp.float32)],
            ),
            compiler_params=pltpu.CompilerParams(
                dimension_semantics=("parallel", "arbitrary"),
                vmem_limit_bytes=_VMEM_LIMIT,
            ),
            cost_estimate=cost,
        )(x_p, w_p, b_p)

    return out[:, :N] if N_pad != N else out


if __name__ == "__main__":
    key = jax.random.PRNGKey(0)
    k_x, k_w, k_b, k_x2 = jax.random.split(key, 4)

    # Small shapes consistent with the module (Classifier_1fc on [B, C]).
    batch = 8
    n_channels = 32
    n_classes = 8

    x = jax.random.normal(k_x, (batch, n_channels), dtype=jnp.float32)
    weight = jax.random.normal(k_w, (n_classes, n_channels), dtype=jnp.float32) * 0.1
    bias = jax.random.normal(k_b, (n_classes,), dtype=jnp.float32) * 0.1

    fwd = jax.jit(functools.partial(classifier_1fc_forward, droprate=0.0))
    out = jax.block_until_ready(fwd(x, weight, bias))

    ref = x @ weight.T + bias
    assert out.shape == (batch, n_classes)
    assert jnp.allclose(out, ref, atol=1e-5, rtol=1e-5)

    # Second check: non-aligned shapes — single full-dim batch block, x unpadded.
    B2, C2, N2 = 300, 200, 10
    x2 = jax.random.normal(k_x2, (B2, C2), dtype=jnp.float32)
    w2 = jax.random.normal(k_w, (N2, C2), dtype=jnp.float32) * 0.1
    b2 = jax.random.normal(k_b, (N2,), dtype=jnp.float32) * 0.1
    out2 = jax.block_until_ready(fwd(x2, w2, b2))
    ref2 = x2 @ w2.T + b2
    assert out2.shape == (B2, N2)
    assert jnp.allclose(out2, ref2, atol=1e-4, rtol=1e-4)

    print("KERNEL_OK")
</pallas_src>

<mosaic_0001>
module attributes {stable_mosaic.version = 11 : i64} {
  func.func @_linear_kernel_fused(%arg0: i32, %arg1: memref<8x32xf32, #tpu.memory_space<vmem>>, %arg2: memref<32x128xf32, #tpu.memory_space<vmem>>, %arg3: memref<1x128xf32, #tpu.memory_space<vmem>>, %arg4: memref<8x128xf32, #tpu.memory_space<vmem>>) attributes {dimension_semantics = [#tpu.dimension_semantics<parallel>], iteration_bounds = array<i64: 1>, scalar_prefetch = 0 : i64, scratch_operands = 0 : i64, tpu.core_type = #tpu.core_type<tc>, window_params = [{transform_indices = @transform_0, window_bounds = array<i64: 8, 32>}, {pipeline_mode = #tpu.pipeline_mode<synchronous>, transform_indices = @transform_1, window_bounds = array<i64: 32, 128>}, {pipeline_mode = #tpu.pipeline_mode<synchronous>, transform_indices = @transform_2, window_bounds = array<i64: 1, 128>}, {transform_indices = @transform_3, window_bounds = array<i64: 8, 128>}]} {
    %c0 = arith.constant 0 : index
    %c0_0 = arith.constant 0 : index
    %0 = vector.load %arg1[%c0, %c0_0] : memref<8x32xf32, #tpu.memory_space<vmem>>, vector<8x32xf32>
    %c0_1 = arith.constant 0 : index
    %c0_2 = arith.constant 0 : index
    %1 = vector.load %arg2[%c0_1, %c0_2] : memref<32x128xf32, #tpu.memory_space<vmem>>, vector<32x128xf32>
    %cst = arith.constant dense<0.000000e+00> : vector<8x128xf32>
    %2 = tpu.matmul %0, %1, %cst {dimension_numbers = #tpu.dot_dimension_numbers<[1], [0], [0], [1], [0, 0, 1, 1], [], []>} : vector<8x32xf32>, vector<32x128xf32>, vector<8x128xf32> -> vector<8x128xf32>
    %c0_3 = arith.constant 0 : index
    %c0_4 = arith.constant 0 : index
    %3 = vector.load %arg3[%c0_3, %c0_4] : memref<1x128xf32, #tpu.memory_space<vmem>>, vector<1x128xf32>
    %4 = vector.broadcast %3 : vector<1x128xf32> to vector<8x128xf32>
    %5 = arith.addf %2, %4 : vector<8x128xf32>
    %c0_5 = arith.constant 0 : index
    %c0_6 = arith.constant 0 : index
    %6 = vector.load %arg4[%c0_5, %c0_6] : memref<8x128xf32, #tpu.memory_space<vmem>>, vector<8x128xf32>
    tpu.vector_store %arg4[%c0_5, %c0_6], %5 {strides = array<i32>} : memref<8x128xf32, #tpu.memory_space<vmem>>, vector<8x128xf32>,
    return
  }
  func.func @transform_0(%arg0: i32) -> (i32, i32) {
    %c0_i32 = arith.constant 0 : i32
    %c0_i32_0 = arith.constant 0 : i32
    return %arg0, %c0_i32 : i32, i32
  }
  func.func @transform_1(%arg0: i32) -> (i32, i32) {
    %c0_i32 = arith.constant 0 : i32
    %c0_i32_0 = arith.constant 0 : i32
    %c0_i32_1 = arith.constant 0 : i32
    return %c0_i32, %c0_i32_0 : i32, i32
  }
  func.func @transform_2(%arg0: i32) -> (i32, i32) {
    %c0_i32 = arith.constant 0 : i32
    %c0_i32_0 = arith.constant 0 : i32
    %c0_i32_1 = arith.constant 0 : i32
    return %c0_i32, %c0_i32_0 : i32, i32
  }
  func.func @transform_3(%arg0: i32) -> (i32, i32) {
    %c0_i32 = arith.constant 0 : i32
    %c0_i32_0 = arith.constant 0 : i32
    return %arg0, %c0_i32 : i32, i32
  }
}

</mosaic_0001>

<llo_original>
// kernel: classifier_1fc_forward.1
$region0: #{classifier_1fc_forward.1}
  #allocation0 [shape = 'u32[]', space=smem, size = 0x4, offset = 0x4, fixed_abs, tag = 'smem constant byte address 0x4 - core index']
  #allocation1 [shape = 'u32[144,128]{1,0:T(1,128)}', space=vmem, size = 0x12000, scoped, tag = 'internal scratch']
  %s0 = inlined_call_operand.vmem [shape: f32[8,32], index: 0, kind: input, shape index: {}]
  %s1 = inlined_call_operand.vmem [shape: f32[32,128], index: 1, kind: input, shape index: {}]
  %s2 = inlined_call_operand.vmem [shape: f32[1,128], index: 2, kind: input, shape index: {}]
  %s3 = inlined_call_operand.hbm [shape: f32[8,128], index: 3, kind: output, shape index: {}]
  %s4 = sld [smem:[#allocation0]]
  $region22: #{classifier_1fc_forward.1} parent=0
    _
  %s6 = ssub.s32 1, %s4
  %s7 = scalar_select 0, %s6, %s4
  $region1: #{classifier_1fc_forward.1} parent=0
    #allocation2 [shape = 'u8[4096]{0}', space=vmem, size = 0x1000, scoped, tag = 'output window, operand 0, single buffered']
    #allocation3 [shape = 's32[1]{0}', space=sflag, size = 0x4, scoped, tag = 'scoped memory for classifier_1fc_forward.1']
    %8 = vsyncpa [#allocation3], 0
    // Predicated region
    $region2: #{classifier_1fc_forward.1} parent=1 // pred_check
      _
    $region3: #{classifier_1fc_forward.1} parent=1 // pred_check_branch
      %10 = sbr.rel (0) target = $region5
    $region4: #{classifier_1fc_forward.1} parent=1 // pred_region
      _
    $region5: #{classifier_1fc_forward.1} parent=1 // pred_fallthru
      _
    // Predicated region
    $region6: #{classifier_1fc_forward.1} parent=1 // pred_check
      _
    $region7: #{classifier_1fc_forward.1} parent=1 // pred_check_branch
      %12 = sbr.rel (0) target = $region9
    $region8: #{classifier_1fc_forward.1} parent=1 // pred_region
      _
    $region9: #{classifier_1fc_forward.1} parent=1 // pred_fallthru
      _
    // Predicated region
    $region10: #{classifier_1fc_forward.1} parent=1 // pred_check
      _
    $region11: #{classifier_1fc_forward.1} parent=1 // pred_check_branch
      %14 = sbr.rel (0) target = $region13
    $region12: #{classifier_1fc_forward.1} parent=1 // pred_region
      _
    $region13: #{classifier_1fc_forward.1} parent=1 // pred_fallthru
      _
    %v15 = vld [vmem:[%s0] sm:$0xff]
    %v16 = vld [vmem:[%s1] sm:$0xff]
    %v17 = vld [vmem:[%s1 + $0x8] sm:$0xff]
    %v18 = vld [vmem:[%s1 + $0x10] sm:$0xff]
    %v19 = vld [vmem:[%s1 + $0x18] sm:$0xff]
    %v20 = vld [vmem:[%s2] sm:$0x1]
    %v22 = vlaneseq
    %v23 = vshrl.u32 %v22, 7
    %v24 = vsub.s32 0, %v23
    %v25 = vrot.slane %v20, %v24
    %vm27 = vcmask 261120
    %v29 = vsel %vm27, %v15, 0
    %31 = vmatprep.subr.mxu0 0.0
    %32 = vmatpush1.msra.mxu0 %v16
    %33 = vmatprep.subr.mxu0 0.0
    %34 = vmatpush1.msra.mxu0 %v17
    %35 = vmatprep.subr.mxu0 0.0
    %36 = vmatpush1.msra.mxu0 %v18
    %37 = vmatprep.subr.mxu0 0.0
    %38 = vmatpush1.msra.mxu0 %v19
    %39 = vmatprep.subr.mxu0 0.0
    %40 = vmatpush1.msra.mxu0 0.0
    %41 = vmatprep.subr.mxu0 0.0
    %42 = vmatpush1.msra.mxu0 0.0
    %43 = vmatprep.subr.mxu0 0.0
    %44 = vmatpush1.msra.mxu0 0.0
    %45 = vmatprep.subr.mxu0 0.0
    %46 = vmatpush1.msra.mxu0 0.0
    %47 = vmatprep.subr.mxu0 0.0
    %48 = vmatpush1.msra.mxu0 0.0
    %49 = vmatprep.subr.mxu0 0.0
    %50 = vmatpush1.msra.mxu0 0.0
    %51 = vmatprep.subr.mxu0 0.0
    %52 = vmatpush1.msra.mxu0 0.0
    %53 = vmatprep.subr.mxu0 0.0
    %54 = vmatpush1.msra.mxu0 0.0
    %55 = vmatprep.subr.mxu0 0.0
    %56 = vmatpush1.msra.mxu0 0.0
    %57 = vmatprep.subr.mxu0 0.0
    %58 = vmatpush1.msra.mxu0 0.0
    %59 = vmatprep.subr.mxu0 0.0
    %60 = vmatpush1.msra.mxu0 0.0
    %61 = vmatprep.subr.mxu0 0.0
    %62 = vmatpush1.msra.mxu0 0.0
    %63 = vmatprep.subr.mxu0 0.0
    %64 = vmatpush1.msra.mxu0 0.0
    %65 = vmatprep.subr.mxu0 0.0
    %66 = vmatpush1.msra.mxu0 0.0
    %67 = vmatprep.subr.mxu0 0.0
    %68 = vmatpush1.msra.mxu0 0.0
    %69 = vmatprep.subr.mxu0 0.0
    %70 = vmatpush1.msra.mxu0 0.0
    %71 = vmatprep.subr.mxu0 0.0
    %72 = vmatpush1.msra.mxu0 0.0
    %73 = vmatprep.subr.mxu0 0.0
    %74 = vmatpush1.msra.mxu0 0.0
    %75 = vmatprep.subr.mxu0 0.0
    %76 = vmatpush1.msra.mxu0 0.0
    %77 = vmatprep.subr.mxu0 0.0
    %78 = vmatpush1.msra.mxu0 0.0
    %79 = vmatprep.subr.mxu0 0.0
    %80 = vmatpush1.msra.mxu0 0.0
    %81 = vmatprep.subr.mxu0 0.0
    %82 = vmatpush1.msra.mxu0 0.0
    %83 = vmatprep.subr.mxu0 0.0
    %84 = vmatpush1.msra.mxu0 0.0
    %85 = vmatprep.subr.mxu0 0.0
    %86 = vmatpush1.msra.mxu0 0.0
    %87 = vmatprep.subr.mxu0 0.0
    %88 = vmatpush1.msra.mxu0 0.0
    %89 = vmatprep.subr.mxu0 0.0
    %90 = vmatpush1.msra.mxu0 0.0
    %91 = vmatprep.subr.mxu0 0.0
    %92 = vmatpush1.msra.mxu0 0.0
    %93 = vmatprep.subr.mxu0 0.0
    %94 = vmatpush1.msra.mxu0 0.0
    %95 = vmatprep.mubr.f32.mxu0 0.0
    %96 = vmatmul.mubr.f32.gmra.mrb[0].mxu0 %v29
    %v97 = vpop.f32.mrb[0].mxu0
    %v98 = vadd.f32 %v25, %v97
    %v99 = vpop.f32.mrb[0].mxu0
    %100 = vdwg.mxu0
    %101 = vst [vmem:[#allocation2] sm:$0xff] %v98
    // Predicated region
    $region14: #{classifier_1fc_forward.1} parent=1 // pred_check
      _
    $region15: #{classifier_1fc_forward.1} parent=1 // pred_check_branch
      %103 = sbr.rel (0) target = $region17
    $region16: #{classifier_1fc_forward.1} parent=1 // pred_region
      %s105 = ssub.s32 128, 128
      %106 = vsyncadd [#allocation3], %s105
      %s108 = sshll.u32 [#allocation2], 4
      %s109 = int_to_ptr.vmem [resolvable:$true] %s108
      %111 = dma.vmem_to_hbm [thread:$0]  %s109, 128, %s3, [#allocation3]
    $region17: #{classifier_1fc_forward.1} parent=1 // pred_fallthru
      _
    // Predicated region
    $region18: #{classifier_1fc_forward.1} parent=1 // pred_check
      _
    $region19: #{classifier_1fc_forward.1} parent=1 // pred_check_branch
      %113 = sbr.rel (0) target = $region21
    $region20: #{classifier_1fc_forward.1} parent=1 // pred_region
      %114 = dma.done [#allocation3], 128
    $region21: #{classifier_1fc_forward.1} parent=1 // pred_fallthru
      _
    %115 = vsyncpa [#allocation3], 1

</llo_original>
